<compile_context>
chip_gen: v6e
topology: v6e:2x2x1
jax: 0.10.0
libtpu: 0.0.40
codegen_flags: <defaults>
</compile_context>

<pallas_src>
import functools

import jax
import jax.numpy as jnp
from jax.experimental import pallas as pl
from jax.experimental.pallas import tpu as pltpu


def _round_up(n: int, m: int) -> int:
    return ((n + m - 1) // m) * m


def _zbl_edge_kernel(x_ref, zu_ref, zv_ref, rmx_ref, o_ref, *,
                     c, a_exp, a_prefactor, p):
    # All refs are (1, tile_e) f32, edges on lanes.
    x = x_ref[...]
    z_u = zu_ref[...]
    z_v = zv_ref[...]
    rmx = rmx_ref[...]

    # a = a_prefactor * 0.529 / (Z_u^a_exp + Z_v^a_exp);  x/a folded into one mul.
    s = z_u ** a_exp + z_v ** a_exp
    r_over_a = x * s * (1.0 / (a_prefactor * 0.529))

    phi = (c[0] * jnp.exp(-3.2 * r_over_a)
           + c[1] * jnp.exp(-0.9423 * r_over_a)
           + c[2] * jnp.exp(-0.4028 * r_over_a)
           + c[3] * jnp.exp(-0.2016 * r_over_a))
    v = (14.3996 * z_u * z_v * phi) / x          # single divide per edge

    # PolynomialCutoff.calculate_envelope with integer p (default 6).
    r = x / rmx
    rp = r ** p                                   # lax.integer_pow (VPU)
    rp1 = rp * r
    rp2 = rp1 * r
    env = (1.0
           - (p + 1.0) * (p + 2.0) / 2.0 * rp
           + p * (p + 2.0) * rp1
           - p * (p + 1.0) / 2.0 * rp2)
    env = jnp.where(x < rmx, env, 0.0)

    o_ref[...] = 0.5 * v * env


def zbl_edge_energies(x_e, z_u, z_v, r_max_e, *, c, a_exp, a_prefactor, p,
                      tile_e=2048):
    """Per-edge ZBL energies. All inputs are 1-D [num_edges] f32 arrays."""
    n = x_e.shape[0]
    # Lane-dense tiling: tile is a multiple of 128, clamped so tiny inputs don't
    # over-pad; padding uses nonzero sentinels so padded lanes compute exactly 0.
    tile_e = max(128, _round_up(min(int(tile_e), _round_up(n, 128)), 128))
    n_pad = _round_up(n, tile_e)
    pad = n_pad - n
    if pad:
        x_e = jnp.concatenate([x_e, jnp.full((pad,), 1.0, x_e.dtype)])
        z_u = jnp.concatenate([z_u, jnp.full((pad,), 1.0, z_u.dtype)])
        z_v = jnp.concatenate([z_v, jnp.full((pad,), 1.0, z_v.dtype)])
        r_max_e = jnp.concatenate([r_max_e, jnp.full((pad,), 0.5, r_max_e.dtype)])

    x2 = x_e.reshape(1, n_pad)
    zu2 = z_u.reshape(1, n_pad)
    zv2 = z_v.reshape(1, n_pad)
    rm2 = r_max_e.reshape(1, n_pad)

    kernel = functools.partial(
        _zbl_edge_kernel,
        c=tuple(float(ci) for ci in c),
        a_exp=float(a_exp),
        a_prefactor=float(a_prefactor),
        p=int(p),
    )

    edge_spec = pl.BlockSpec((1, tile_e), lambda i: (0, i))
    out = pl.pallas_call(
        kernel,
        out_shape=jax.ShapeDtypeStruct((1, n_pad), jnp.float32),
        grid_spec=pltpu.PrefetchScalarGridSpec(
            num_scalar_prefetch=0,
            grid=(n_pad // tile_e,),
            in_specs=[edge_spec, edge_spec, edge_spec, edge_spec],
            out_specs=edge_spec,
        ),
        compiler_params=pltpu.CompilerParams(
            dimension_semantics=("parallel",),
        ),
    )(x2, zu2, zv2, rm2)
    return out[0, :n]


def zbl_basis_forward(x, node_attrs, edge_index, atomic_numbers, covalent_radii,
                      *, p=6, a_exp=0.3, a_prefactor=0.4543,
                      c=(0.1818, 0.5099, 0.2802, 0.02817), tile_e=2048):
    """ZBLBasis.forward.  x: [E,1] f32, node_attrs: [N,elems] one-hot,
    edge_index: [2,E] int, atomic_numbers: [elems] int, covalent_radii: [Zmax+1] f32.
    Returns V_ZBL: [N] f32."""
    num_nodes = node_attrs.shape[0]
    sender = edge_index[0]
    receiver = edge_index[1]

    # TODO(synk): the data-dependent gathers (one-hot argmax -> atomic number,
    # covalent-radii table lookup) and the final scatter_sum to nodes have no
    # clean Pallas equivalent; they are done in JAX around the per-edge kernel.
    node_z = atomic_numbers[jnp.argmax(node_attrs, axis=1)]          # [N] int
    z_u_i = node_z[sender]
    z_v_i = node_z[receiver]
    z_u = z_u_i.astype(jnp.float32)
    z_v = z_v_i.astype(jnp.float32)
    r_max_e = (covalent_radii[z_u_i] + covalent_radii[z_v_i]).astype(jnp.float32)
    x_e = x[:, 0].astype(jnp.float32)

    v_edges = zbl_edge_energies(x_e, z_u, z_v, r_max_e, c=c, a_exp=a_exp,
                                a_prefactor=a_prefactor, p=p, tile_e=tile_e)
    return jax.ops.segment_sum(v_edges, receiver, num_segments=num_nodes)


def zbl_basis_reference(x, node_attrs, edge_index, atomic_numbers, covalent_radii,
                        *, p=6, a_exp=0.3, a_prefactor=0.4543,
                        c=(0.1818, 0.5099, 0.2802, 0.02817)):
    """Pure-JAX reference matching the PyTorch ZBLBasis.forward."""
    num_nodes = node_attrs.shape[0]
    sender = edge_index[0]
    receiver = edge_index[1]
    node_z = atomic_numbers[jnp.argmax(node_attrs, axis=1)]
    Z_u = node_z[sender].astype(jnp.float32)
    Z_v = node_z[receiver].astype(jnp.float32)
    xe = x[:, 0].astype(jnp.float32)
    a = a_prefactor * 0.529 / (Z_u ** a_exp + Z_v ** a_exp)
    r_over_a = xe / a
    phi = (c[0] * jnp.exp(-3.2 * r_over_a)
           + c[1] * jnp.exp(-0.9423 * r_over_a)
           + c[2] * jnp.exp(-0.4028 * r_over_a)
           + c[3] * jnp.exp(-0.2016 * r_over_a))
    v_edges = 14.3996 * Z_u * Z_v / xe * phi
    r_max = covalent_radii[node_z[sender]] + covalent_radii[node_z[receiver]]
    r_over = xe / r_max
    env = (1.0
           - (p + 1.0) * (p + 2.0) / 2.0 * r_over ** p
           + p * (p + 2.0) * r_over ** (p + 1)
           - p * (p + 1.0) / 2.0 * r_over ** (p + 2))
    env = env * (xe < r_max)
    v_edges = 0.5 * v_edges * env
    return jax.ops.segment_sum(v_edges, receiver, num_segments=num_nodes)


if __name__ == "__main__":
    key = jax.random.PRNGKey(0)
    num_nodes = 32
    num_edges = 1000          # pads to 1024 -> 2 grid steps of 512 lanes
    num_elements = 4

    atomic_numbers = jnp.array([1, 6, 7, 8], dtype=jnp.int32)   # H, C, N, O
    # ASE covalent radii (Angstrom) for Z = 0..8 (only entries up to max Z used).
    covalent_radii = jnp.array(
        [0.20, 0.31, 0.28, 1.28, 0.96, 0.84, 0.76, 0.71, 0.66],
        dtype=jnp.float32)

    k1, k2, k3 = jax.random.split(key, 3)
    elem = jax.random.randint(k1, (num_nodes,), 0, num_elements)
    node_attrs = jax.nn.one_hot(elem, num_elements, dtype=jnp.float32)
    edge_index = jax.random.randint(k2, (2, num_edges), 0, num_nodes,
                                    dtype=jnp.int32)
    x = jax.random.uniform(k3, (num_edges, 1), dtype=jnp.float32,
                           minval=0.2, maxval=2.5)

    out = zbl_basis_forward(x, node_attrs, edge_index, atomic_numbers,
                            covalent_radii, tile_e=512)
    out = jax.block_until_ready(out)

    ref = zbl_basis_reference(x, node_attrs, edge_index, atomic_numbers,
                              covalent_radii)
    assert out.shape == (num_nodes,)
    assert jnp.allclose(out, ref, rtol=2e-4, atol=1e-3), "mismatch vs reference"

    print("KERNEL_OK")
</pallas_src>

<mosaic_0001>
module attributes {stable_mosaic.version = 11 : i64} {
  func.func @_zbl_edge_kernel(%arg0: i32, %arg1: memref<1x512xf32, #tpu.memory_space<vmem>>, %arg2: memref<1x512xf32, #tpu.memory_space<vmem>>, %arg3: memref<1x512xf32, #tpu.memory_space<vmem>>, %arg4: memref<1x512xf32, #tpu.memory_space<vmem>>, %arg5: memref<1x512xf32, #tpu.memory_space<vmem>>) attributes {dimension_semantics = [#tpu.dimension_semantics<parallel>], iteration_bounds = array<i64: 2>, scalar_prefetch = 0 : i64, scratch_operands = 0 : i64, tpu.core_type = #tpu.core_type<tc>, window_params = [{transform_indices = @transform_0, window_bounds = array<i64: 1, 512>}, {transform_indices = @transform_1, window_bounds = array<i64: 1, 512>}, {transform_indices = @transform_2, window_bounds = array<i64: 1, 512>}, {transform_indices = @transform_3, window_bounds = array<i64: 1, 512>}, {transform_indices = @transform_4, window_bounds = array<i64: 1, 512>}]} {
    %c0 = arith.constant 0 : index
    %c0_0 = arith.constant 0 : index
    %0 = vector.load %arg1[%c0, %c0_0] : memref<1x512xf32, #tpu.memory_space<vmem>>, vector<1x512xf32>
    %c0_1 = arith.constant 0 : index
    %c0_2 = arith.constant 0 : index
    %1 = vector.load %arg2[%c0_1, %c0_2] : memref<1x512xf32, #tpu.memory_space<vmem>>, vector<1x512xf32>
    %c0_3 = arith.constant 0 : index
    %c0_4 = arith.constant 0 : index
    %2 = vector.load %arg3[%c0_3, %c0_4] : memref<1x512xf32, #tpu.memory_space<vmem>>, vector<1x512xf32>
    %c0_5 = arith.constant 0 : index
    %c0_6 = arith.constant 0 : index
    %3 = vector.load %arg4[%c0_5, %c0_6] : memref<1x512xf32, #tpu.memory_space<vmem>>, vector<1x512xf32>
    %cst = arith.constant 3.000000e-01 : f32
    %4 = vector.broadcast %cst : f32 to vector<1x512xf32>
    %5 = math.powf %1, %4 : vector<1x512xf32>
    %cst_7 = arith.constant 3.000000e-01 : f32
    %6 = vector.broadcast %cst_7 : f32 to vector<1x512xf32>
    %7 = math.powf %2, %6 : vector<1x512xf32>
    %8 = arith.addf %5, %7 : vector<1x512xf32>
    %9 = arith.mulf %0, %8 : vector<1x512xf32>
    %cst_8 = arith.constant 4.16103697 : f32
    %10 = vector.broadcast %cst_8 : f32 to vector<1x512xf32>
    %11 = arith.mulf %9, %10 : vector<1x512xf32>
    %cst_9 = arith.constant -3.200000e+00 : f32
    %12 = vector.broadcast %cst_9 : f32 to vector<1x512xf32>
    %13 = arith.mulf %12, %11 : vector<1x512xf32>
    %14 = math.exp %13 : vector<1x512xf32>
    %cst_10 = arith.constant 1.818000e-01 : f32
    %15 = vector.broadcast %cst_10 : f32 to vector<1x512xf32>
    %16 = arith.mulf %15, %14 : vector<1x512xf32>
    %cst_11 = arith.constant -9.423000e-01 : f32
    %17 = vector.broadcast %cst_11 : f32 to vector<1x512xf32>
    %18 = arith.mulf %17, %11 : vector<1x512xf32>
    %19 = math.exp %18 : vector<1x512xf32>
    %cst_12 = arith.constant 5.099000e-01 : f32
    %20 = vector.broadcast %cst_12 : f32 to vector<1x512xf32>
    %21 = arith.mulf %20, %19 : vector<1x512xf32>
    %22 = arith.addf %16, %21 : vector<1x512xf32>
    %cst_13 = arith.constant -4.028000e-01 : f32
    %23 = vector.broadcast %cst_13 : f32 to vector<1x512xf32>
    %24 = arith.mulf %23, %11 : vector<1x512xf32>
    %25 = math.exp %24 : vector<1x512xf32>
    %cst_14 = arith.constant 2.802000e-01 : f32
    %26 = vector.broadcast %cst_14 : f32 to vector<1x512xf32>
    %27 = arith.mulf %26, %25 : vector<1x512xf32>
    %28 = arith.addf %22, %27 : vector<1x512xf32>
    %cst_15 = arith.constant -2.016000e-01 : f32
    %29 = vector.broadcast %cst_15 : f32 to vector<1x512xf32>
    %30 = arith.mulf %29, %11 : vector<1x512xf32>
    %31 = math.exp %30 : vector<1x512xf32>
    %cst_16 = arith.constant 2.817000e-02 : f32
    %32 = vector.broadcast %cst_16 : f32 to vector<1x512xf32>
    %33 = arith.mulf %32, %31 : vector<1x512xf32>
    %34 = arith.addf %28, %33 : vector<1x512xf32>
    %cst_17 = arith.constant 1.439960e+01 : f32
    %35 = vector.broadcast %cst_17 : f32 to vector<1x512xf32>
    %36 = arith.mulf %35, %1 : vector<1x512xf32>
    %37 = arith.mulf %36, %2 : vector<1x512xf32>
    %38 = arith.mulf %37, %34 : vector<1x512xf32>
    %39 = arith.divf %38, %0 : vector<1x512xf32>
    %40 = arith.divf %0, %3 : vector<1x512xf32>
    %41 = arith.mulf %40, %40 : vector<1x512xf32>
    %42 = arith.mulf %41, %41 : vector<1x512xf32>
    %43 = arith.mulf %41, %42 : vector<1x512xf32>
    %44 = arith.mulf %43, %40 : vector<1x512xf32>
    %45 = arith.mulf %44, %40 : vector<1x512xf32>
    %cst_18 = arith.constant 2.800000e+01 : f32
    %46 = vector.broadcast %cst_18 : f32 to vector<1x512xf32>
    %47 = arith.mulf %46, %43 : vector<1x512xf32>
    %cst_19 = arith.constant 1.000000e+00 : f32
    %48 = vector.broadcast %cst_19 : f32 to vector<1x512xf32>
    %49 = arith.subf %48, %47 : vector<1x512xf32>
    %cst_20 = arith.constant 4.800000e+01 : f32
    %50 = vector.broadcast %cst_20 : f32 to vector<1x512xf32>
    %51 = arith.mulf %50, %44 : vector<1x512xf32>
    %52 = arith.addf %49, %51 : vector<1x512xf32>
    %cst_21 = arith.constant 2.100000e+01 : f32
    %53 = vector.broadcast %cst_21 : f32 to vector<1x512xf32>
    %54 = arith.mulf %53, %45 : vector<1x512xf32>
    %55 = arith.subf %52, %54 : vector<1x512xf32>
    %56 = arith.cmpf olt, %0, %3 : vector<1x512xf32>
    %cst_22 = arith.constant 0.000000e+00 : f32
    %57 = vector.broadcast %cst_22 : f32 to vector<1x512xf32>
    %58 = arith.select %56, %55, %57 : vector<1x512xi1>, vector<1x512xf32>
    %cst_23 = arith.constant 5.000000e-01 : f32
    %59 = vector.broadcast %cst_23 : f32 to vector<1x512xf32>
    %60 = arith.mulf %59, %39 : vector<1x512xf32>
    %61 = arith.mulf %60, %58 : vector<1x512xf32>
    %c0_24 = arith.constant 0 : index
    %c0_25 = arith.constant 0 : index
    %62 = vector.load %arg5[%c0_24, %c0_25] : memref<1x512xf32, #tpu.memory_space<vmem>>, vector<1x512xf32>
    tpu.vector_store %arg5[%c0_24, %c0_25], %61 {strides = array<i32>} : memref<1x512xf32, #tpu.memory_space<vmem>>, vector<1x512xf32>,
    return
  }
  func.func @transform_0(%arg0: i32) -> (i32, i32) {
    %c0_i32 = arith.constant 0 : i32
    %c0_i32_0 = arith.constant 0 : i32
    return %c0_i32, %arg0 : i32, i32
  }
  func.func @transform_1(%arg0: i32) -> (i32, i32) {
    %c0_i32 = arith.constant 0 : i32
    %c0_i32_0 = arith.constant 0 : i32
    return %c0_i32, %arg0 : i32, i32
  }
  func.func @transform_2(%arg0: i32) -> (i32, i32) {
    %c0_i32 = arith.constant 0 : i32
    %c0_i32_0 = arith.constant 0 : i32
    return %c0_i32, %arg0 : i32, i32
  }
  func.func @transform_3(%arg0: i32) -> (i32, i32) {
    %c0_i32 = arith.constant 0 : i32
    %c0_i32_0 = arith.constant 0 : i32
    return %c0_i32, %arg0 : i32, i32
  }
  func.func @transform_4(%arg0: i32) -> (i32, i32) {
    %c0_i32 = arith.constant 0 : i32
    %c0_i32_0 = arith.constant 0 : i32
    return %c0_i32, %arg0 : i32, i32
  }
}

</mosaic_0001>

<llo_original>
// kernel: tpu_custom_call.1
$region0: #{tpu_custom_call.1}
  #allocation0 [shape = 'u32[]', space=smem, size = 0x4, offset = 0x4, fixed_abs, tag = 'smem constant byte address 0x4 - core index']
  #allocation1 [shape = 'u32[144,128]{1,0:T(1,128)}', space=vmem, size = 0x12000, scoped, tag = 'internal scratch']
  %s0 = inlined_call_operand.hbm [shape: f32[1,1024], index: 0, kind: input, shape index: {}]
  %s1 = inlined_call_operand.hbm [shape: f32[1,1024], index: 1, kind: input, shape index: {}]
  %s2 = inlined_call_operand.hbm [shape: f32[1,1024], index: 2, kind: input, shape index: {}]
  %s3 = inlined_call_operand.hbm [shape: f32[1,1024], index: 3, kind: input, shape index: {}]
  %s4 = inlined_call_operand.hbm [shape: f32[1,1024], index: 4, kind: output, shape index: {}]
  %s5 = sld [smem:[#allocation0]]
  $region65: #{tpu_custom_call.1} parent=0
    _
  %s7 = ssub.s32 1, %s5
  %s8 = scalar_select 0, %s7, %s5
  $region1: #{tpu_custom_call.1} parent=0
    #allocation2 [shape = 'u8[4096]{0}', space=vmem, size = 0x1000, scoped, tag = 'input window, operand 0']
    #allocation3 [shape = 's32[2]{0}', space=sflag, size = 0x8, scoped, tag = 'scoped memory for tpu_custom_call.1']
    #allocation4 [shape = 's32[2]{0}', space=sflag, size = 0x8, scoped, tag = 'scoped memory for tpu_custom_call.1']
    #allocation5 [shape = 'u8[4096]{0}', space=vmem, size = 0x1000, scoped, tag = 'input window, operand 1']
    #allocation6 [shape = 's32[2]{0}', space=sflag, size = 0x8, scoped, tag = 'scoped memory for tpu_custom_call.1']
    #allocation7 [shape = 'u8[4096]{0}', space=vmem, size = 0x1000, scoped, tag = 'input window, operand 2']
    #allocation8 [shape = 'u8[4096]{0}', space=vmem, size = 0x1000, scoped, tag = 'input window, operand 3']
    #allocation9 [shape = 's32[2]{0}', space=sflag, size = 0x8, scoped, tag = 'scoped memory for tpu_custom_call.1']
    #allocation10 [shape = 'u8[4096]{0}', space=vmem, size = 0x1000, scoped, tag = 'output window, operand 0']
    %9 = vsyncpa [#allocation3], 0
    %s10 = scalar_lea.sflag [#allocation3], 1
    %11 = vsyncpa %s10, 0
    %12 = vsyncpa [#allocation6], 0
    %s13 = scalar_lea.sflag [#allocation6], 1
    %14 = vsyncpa %s13, 0
    %15 = vsyncpa [#allocation9], 0
    %s16 = scalar_lea.sflag [#allocation9], 1
    %17 = vsyncpa %s16, 0
    %18 = vsyncpa [#allocation4], 0
    %s19 = scalar_lea.sflag [#allocation4], 1
    %20 = vsyncpa %s19, 0
    loop: start=0, step=1, limit=4
    $region2: #{tpu_custom_call.1} parent=1 // loop_pre_header
      _
    $region3: #{tpu_custom_call.1} parent=1 // loop_header
      %s22 = sphi 0, %s26
      %p23 = scmp.ge.s32.totalorder %s22, 4
      %s32 = sphi 0, %s34
      %s35 = sphi 0, %s32
      %s36 = sphi 0, %s35
      %s52 = sphi 0, %s36
      %s58 = sphi 0, %s60
      %s61 = sphi 0, %s58
      %s62 = sphi 0, %s61
      %s78 = sphi 0, %s62
      %s84 = sphi 0, %s86
      %s87 = sphi 0, %s84
      %s88 = sphi 0, %s87
      %s104 = sphi 0, %s88
      %s110 = sphi 0, %s112
      %s113 = sphi 0, %s110
      %s114 = sphi 0, %s113
      %s130 = sphi 0, %s114
      %s136 = sphi 0, %s138
      %s139 = sphi 0, %s136
      %s140 = sphi 0, %s139
      %s156 = sphi 0, %s140
    $region4: #{tpu_custom_call.1} parent=1 // loop_header_branch
      %25 = sbr.rel (%p23) target = $region8
    $region5: #{tpu_custom_call.1} parent=1 // loop_body
      %s27 = ssub.s32 %s22, 1
      %s28 = ssub.s32 %s22, 2
      %s29 = sadd.s32 %s22, 1
      %s30 = ssub.s32 %s22, %s29
      %p31 = scmp.eq.s32.totalorder %s30, 0
      %s33 = sadd.s32 %s32, 1
      %s34 = scalar_select %p31, %s32, %s33
      %p37 = pneg %p31
      %p38 = scmp.eq.s32.totalorder %s22, 1
      %p39 = por %p37, %p38
      %p40 = scmp.ne.s32.totalorder %s32, %s35
      %p41 = scmp.eq.s32.totalorder %s22, 0
      %p42 = por %p40, %p41
      %p43 = scmp.ne.s32.totalorder %s32, %s35
      %p44 = scmp.eq.s32.totalorder %s27, 1
      %p45 = por %p43, %p44
      %p46 = scmp.ne.s32.totalorder %s35, %s36
      %p47 = scmp.eq.s32.totalorder %s27, 0
      %p48 = por %p46, %p47
      %p49 = scmp.ne.s32.totalorder %s35, %s36
      %p50 = scmp.eq.s32.totalorder %s28, 1
      %p51 = por %p49, %p50
      %p53 = scmp.ne.s32.totalorder %s36, %s52
      %p54 = scmp.eq.s32.totalorder %s28, 0
      %p55 = por %p53, %p54
      %s56 = ssub.s32 %s22, %s29
      %p57 = scmp.eq.s32.totalorder %s56, 0
      %s59 = sadd.s32 %s58, 1
      %s60 = scalar_select %p57, %s58, %s59
      %p63 = pneg %p57
      %p64 = scmp.eq.s32.totalorder %s22, 1
      %p65 = por %p63, %p64
      %p66 = scmp.ne.s32.totalorder %s58, %s61
      %p67 = scmp.eq.s32.totalorder %s22, 0
      %p68 = por %p66, %p67
      %p69 = scmp.ne.s32.totalorder %s58, %s61
      %p70 = scmp.eq.s32.totalorder %s27, 1
      %p71 = por %p69, %p70
      %p72 = scmp.ne.s32.totalorder %s61, %s62
      %p73 = scmp.eq.s32.totalorder %s27, 0
      %p74 = por %p72, %p73
      %p75 = scmp.ne.s32.totalorder %s61, %s62
      %p76 = scmp.eq.s32.totalorder %s28, 1
      %p77 = por %p75, %p76
      %p79 = scmp.ne.s32.totalorder %s62, %s78
      %p80 = scmp.eq.s32.totalorder %s28, 0
      %p81 = por %p79, %p80
      %s82 = ssub.s32 %s22, %s29
      %p83 = scmp.eq.s32.totalorder %s82, 0
      %s85 = sadd.s32 %s84, 1
      %s86 = scalar_select %p83, %s84, %s85
      %p89 = pneg %p83
      %p90 = scmp.eq.s32.totalorder %s22, 1
      %p91 = por %p89, %p90
      %p92 = scmp.ne.s32.totalorder %s84, %s87
      %p93 = scmp.eq.s32.totalorder %s22, 0
      %p94 = por %p92, %p93
      %p95 = scmp.ne.s32.totalorder %s84, %s87
      %p96 = scmp.eq.s32.totalorder %s27, 1
      %p97 = por %p95, %p96
      %p98 = scmp.ne.s32.totalorder %s87, %s88
      %p99 = scmp.eq.s32.totalorder %s27, 0
      %p100 = por %p98, %p99
      %p101 = scmp.ne.s32.totalorder %s87, %s88
      %p102 = scmp.eq.s32.totalorder %s28, 1
      %p103 = por %p101, %p102
      %p105 = scmp.ne.s32.totalorder %s88, %s104
      %p106 = scmp.eq.s32.totalorder %s28, 0
      %p107 = por %p105, %p106
      %s108 = ssub.s32 %s22, %s29
      %p109 = scmp.eq.s32.totalorder %s108, 0
      %s111 = sadd.s32 %s110, 1
      %s112 = scalar_select %p109, %s110, %s111
      %p115 = pneg %p109
      %p116 = scmp.eq.s32.totalorder %s22, 1
      %p117 = por %p115, %p116
      %p118 = scmp.ne.s32.totalorder %s110, %s113
      %p119 = scmp.eq.s32.totalorder %s22, 0
      %p120 = por %p118, %p119
      %p121 = scmp.ne.s32.totalorder %s110, %s113
      %p122 = scmp.eq.s32.totalorder %s27, 1
      %p123 = por %p121, %p122
      %p124 = scmp.ne.s32.totalorder %s113, %s114
      %p125 = scmp.eq.s32.totalorder %s27, 0
      %p126 = por %p124, %p125
      %p127 = scmp.ne.s32.totalorder %s113, %s114
      %p128 = scmp.eq.s32.totalorder %s28, 1
      %p129 = por %p127, %p128
      %p131 = scmp.ne.s32.totalorder %s114, %s130
      %p132 = scmp.eq.s32.totalorder %s28, 0
      %p133 = por %p131, %p132
      %s134 = ssub.s32 %s22, %s29
      %p135 = scmp.eq.s32.totalorder %s134, 0
      %s137 = sadd.s32 %s136, 1
      %s138 = scalar_select %p135, %s136, %s137
      %p141 = pneg %p135
      %p142 = scmp.eq.s32.totalorder %s22, 1
      %p143 = por %p141, %p142
      %p144 = scmp.ne.s32.totalorder %s136, %s139
      %p145 = scmp.eq.s32.totalorder %s22, 0
      %p146 = por %p144, %p145
      %p147 = scmp.ne.s32.totalorder %s136, %s139
      %p148 = scmp.eq.s32.totalorder %s27, 1
      %p149 = por %p147, %p148
      %p150 = scmp.ne.s32.totalorder %s139, %s140
      %p151 = scmp.eq.s32.totalorder %s27, 0
      %p152 = por %p150, %p151
      %p153 = scmp.ne.s32.totalorder %s139, %s140
      %p154 = scmp.eq.s32.totalorder %s28, 1
      %p155 = por %p153, %p154
      %p157 = scmp.ne.s32.totalorder %s140, %s156
      %p158 = scmp.eq.s32.totalorder %s28, 0
      %p159 = por %p157, %p158
      %p160 = scmp.le.s32.totalorder 1, %s22
      %p161 = scmp.lt.s32.totalorder %s22, 3
      %p162 = pnand %p160, %p161
      %p163 = pneg %p162
      // Predicated region
      $region9: #{tpu_custom_call.1} parent=5 // pred_check
        _
      $region10: #{tpu_custom_call.1} parent=5 // pred_check_branch
        %165 = sbr.rel (%p162) target = $region12
      $region11: #{tpu_custom_call.1} parent=5 // pred_region
        %s166 = ssub.s32 %s22, 1
      $region12: #{tpu_custom_call.1} parent=5 // pred_fallthru
        _
      %p167 = scmp.lt.s32.totalorder %s22, 2
      // Predicated region
      $region13: #{tpu_custom_call.1} parent=5 // pred_check
        %p168 = pneg %p167
      $region14: #{tpu_custom_call.1} parent=5 // pred_check_branch
        %170 = sbr.rel (%p168) target = $region16
      $region15: #{tpu_custom_call.1} parent=5 // pred_region
        // Predicated region
        $region17: #{tpu_custom_call.1} parent=15 // pred_check
          %p171 = pneg %p42
        $region18: #{tpu_custom_call.1} parent=15 // pred_check_branch
          %173 = sbr.rel (%p171) target = $region20
        $region19: #{tpu_custom_call.1} parent=15 // pred_region
          %s174 = sand.u32 %s32, 1
          %s175 = scalar_lea.sflag [#allocation3], %s174
          %s176 = sand.u32 %s32, 1
          %s177 = smul.addr %s176, 4
          %s178 = scalar_lea.vmem [#allocation2], %s177
          %s179 = smul.u32 4, %s22
          %s181 = ssub.s32 64, 64
          %182 = vsyncadd %s175, %s181
          %s183 = smul.addr %s179, 16
          %s184 = scalar_lea.hbm %s0, %s183
          %s186 = sshll.u32 %s178, 4
          %s187 = int_to_ptr.vmem [resolvable:$true] %s186
          %189 = dma.hbm_to_vmem [thread:$0]  %s184, 64, %s187, %s175
        $region20: #{tpu_custom_call.1} parent=15 // pred_fallthru
          _
        // Predicated region
        $region21: #{tpu_custom_call.1} parent=15 // pred_check
          %p190 = pneg %p68
        $region22: #{tpu_custom_call.1} parent=15 // pred_check_branch
          %192 = sbr.rel (%p190) target = $region24
        $region23: #{tpu_custom_call.1} parent=15 // pred_region
          %s193 = sand.u32 %s22, 1
          %s194 = scalar_lea.sflag [#allocation6], %s193
          %s195 = sand.u32 %s58, 1
          %s196 = smul.addr %s195, 4
          %s197 = scalar_lea.vmem [#allocation5], %s196
          %s198 = smul.u32 4, %s22
          %s200 = ssub.s32 64, 64
          %201 = vsyncadd %s194, %s200
          %s202 = smul.addr %s198, 16
          %s203 = scalar_lea.hbm %s1, %s202
          %s205 = sshll.u32 %s197, 4
          %s206 = int_to_ptr.vmem [resolvable:$true] %s205
          %208 = dma.hbm_to_vmem [thread:$0]  %s203, 64, %s206, %s194
        $region24: #{tpu_custom_call.1} parent=15 // pred_fallthru
          _
        // Predicated region
        $region25: #{tpu_custom_call.1} parent=15 // pred_check
          %p209 = pneg %p94
        $region26: #{tpu_custom_call.1} parent=15 // pred_check_branch
          %211 = sbr.rel (%p209) target = $region28
        $region27: #{tpu_custom_call.1} parent=15 // pred_region
          %s212 = sand.u32 %s22, 1
          %s213 = scalar_lea.sflag [#allocation6], %s212
          %s214 = sand.u32 %s84, 1
          %s215 = smul.addr %s214, 4
          %s216 = scalar_lea.vmem [#allocation7], %s215
          %s217 = smul.u32 4, %s22
          %s219 = ssub.s32 64, 64
          %220 = vsyncadd %s213, %s219
          %s221 = smul.addr %s217, 16
          %s222 = scalar_lea.hbm %s2, %s221
          %s224 = sshll.u32 %s216, 4
          %s225 = int_to_ptr.vmem [resolvable:$true] %s224
          %227 = dma.hbm_to_vmem [thread:$0]  %s222, 64, %s225, %s213
        $region28: #{tpu_custom_call.1} parent=15 // pred_fallthru
          _
        // Predicated region
        $region29: #{tpu_custom_call.1} parent=15 // pred_check
          %p228 = pneg %p120
        $region30: #{tpu_custom_call.1} parent=15 // pred_check_branch
          %230 = sbr.rel (%p228) target = $region32
        $region31: #{tpu_custom_call.1} parent=15 // pred_region
          %s231 = sand.u32 %s110, 1
          %s232 = scalar_lea.sflag [#allocation9], %s231
          %s233 = sand.u32 %s110, 1
          %s234 = smul.addr %s233, 4
          %s235 = scalar_lea.vmem [#allocation8], %s234
          %s236 = smul.u32 4, %s22
          %s238 = ssub.s32 64, 64
          %239 = vsyncadd %s232, %s238
          %s240 = smul.addr %s236, 16
          %s241 = scalar_lea.hbm %s3, %s240
          %s243 = sshll.u32 %s235, 4
          %s244 = int_to_ptr.vmem [resolvable:$true] %s243
          %246 = dma.hbm_to_vmem [thread:$0]  %s241, 64, %s244, %s232
        $region32: #{tpu_custom_call.1} parent=15 // pred_fallthru
          _
      $region16: #{tpu_custom_call.1} parent=5 // pred_fallthru
        _
      %p247 = scmp.le.s32.totalorder 1, %s22
      %p248 = scmp.lt.s32.totalorder %s22, 3
      %p249 = pnand %p247, %p248
      %p250 = pneg %p249
      // Predicated region
      $region33: #{tpu_custom_call.1} parent=5 // pred_check
        _
      $region34: #{tpu_custom_call.1} parent=5 // pred_check_branch
        %252 = sbr.rel (%p249) target = $region36
      $region35: #{tpu_custom_call.1} parent=5 // pred_region
        %s253 = ssub.s32 %s22, 1
        %s254 = sand.u32 %s35, 1
        %s255 = scalar_lea.sflag [#allocation3], %s254
        %s256 = sand.u32 %s35, 1
        %s257 = smul.addr %s256, 4
        %s258 = scalar_lea.vmem [#allocation2], %s257
        // Predicated region
        $region37: #{tpu_custom_call.1} parent=35 // pred_check
          %p259 = pneg %p48
        $region38: #{tpu_custom_call.1} parent=35 // pred_check_branch
          %261 = sbr.rel (%p259) target = $region40
        $region39: #{tpu_custom_call.1} parent=35 // pred_region
          %262 = dma.done %s255, 64
        $region40: #{tpu_custom_call.1} parent=35 // pred_fallthru
          _
        %s263 = sand.u32 %s27, 1
        %s264 = scalar_lea.sflag [#allocation6], %s263
        %s265 = sand.u32 %s61, 1
        %s266 = smul.addr %s265, 4
        %s267 = scalar_lea.vmem [#allocation5], %s266
        // Predicated region
        $region41: #{tpu_custom_call.1} parent=35 // pred_check
          %p268 = pneg %p74
        $region42: #{tpu_custom_call.1} parent=35 // pred_check_branch
          %270 = sbr.rel (%p268) target = $region44
        $region43: #{tpu_custom_call.1} parent=35 // pred_region
          %271 = dma.done %s264, 64
        $region44: #{tpu_custom_call.1} parent=35 // pred_fallthru
          _
        %s272 = sand.u32 %s27, 1
        %s273 = scalar_lea.sflag [#allocation6], %s272
        %s274 = sand.u32 %s87, 1
        %s275 = smul.addr %s274, 4
        %s276 = scalar_lea.vmem [#allocation7], %s275
        // Predicated region
        $region45: #{tpu_custom_call.1} parent=35 // pred_check
          %p277 = pneg %p100
        $region46: #{tpu_custom_call.1} parent=35 // pred_check_branch
          %279 = sbr.rel (%p277) target = $region48
        $region47: #{tpu_custom_call.1} parent=35 // pred_region
          %280 = dma.done %s273, 64
        $region48: #{tpu_custom_call.1} parent=35 // pred_fallthru
          _
        %s281 = sand.u32 %s113, 1
        %s282 = scalar_lea.sflag [#allocation9], %s281
        %s283 = sand.u32 %s113, 1
        %s284 = smul.addr %s283, 4
        %s285 = scalar_lea.vmem [#allocation8], %s284
        // Predicated region
        $region49: #{tpu_custom_call.1} parent=35 // pred_check
          %p286 = pneg %p126
        $region50: #{tpu_custom_call.1} parent=35 // pred_check_branch
          %288 = sbr.rel (%p286) target = $region52
        $region51: #{tpu_custom_call.1} parent=35 // pred_region
          %289 = dma.done %s282, 64
        $region52: #{tpu_custom_call.1} parent=35 // pred_fallthru
          _
        %s290 = sand.u32 %s35, 1
        %s291 = scalar_lea.sflag [#allocation3], %s290
        %s292 = sand.u32 %s35, 1
        %s293 = smul.addr %s292, 4
        %s294 = scalar_lea.vmem [#allocation2], %s293
        %p295 = pneg %p48
        %p296 = pneg %p45
        %s297 = sand.u32 %s27, 1
        %s298 = scalar_lea.sflag [#allocation6], %s297
        %s299 = sand.u32 %s61, 1
        %s300 = smul.addr %s299, 4
        %s301 = scalar_lea.vmem [#allocation5], %s300
        %p302 = pneg %p74
        %p303 = pneg %p71
        %s304 = sand.u32 %s27, 1
        %s305 = scalar_lea.sflag [#allocation6], %s304
        %s306 = sand.u32 %s87, 1
        %s307 = smul.addr %s306, 4
        %s308 = scalar_lea.vmem [#allocation7], %s307
        %p309 = pneg %p100
        %p310 = pneg %p97
        %s311 = sand.u32 %s113, 1
        %s312 = scalar_lea.sflag [#allocation9], %s311
        %s313 = sand.u32 %s113, 1
        %s314 = smul.addr %s313, 4
        %s315 = scalar_lea.vmem [#allocation8], %s314
        %p316 = pneg %p126
        %p317 = pneg %p123
        %p318 = pneg %p152
        %p319 = pneg %p149
        %s320 = sand.u32 %s139, 1
        %s321 = scalar_lea.sflag [#allocation4], %s320
        %s322 = sand.u32 %s139, 1
        %s323 = smul.addr %s322, 4
        %s324 = scalar_lea.vmem [#allocation10], %s323
        %s325 = smul.u32 4, %s27
        %s326 = smul.u32 4, %s27
        %s327 = smul.u32 4, %s27
        %s328 = smul.u32 4, %s27
        %s329 = smul.u32 4, %s27
        %v330 = vld [vmem:[%s258] sm:$0xf]
        %v331 = vld [vmem:[%s267] sm:$0xf]
        %v332 = vld [vmem:[%s276] sm:$0xf]
        %v333 = vld [vmem:[%s285] sm:$0xf]
        %v334 = vpow.f32 %v331, 0.3
        %v335 = vpow.f32 %v332, 0.3
        %v336 = vadd.f32 %v334, %v335
        %v337 = vmul.f32 %v330, %v336
        %v338 = vmul.f32 %v337, 4.161037
        %v339 = vmul.f32 %v338, -3.2
        %v340 = vmul.f32 %v339, 1.442695
        %v341 = vpow.pop %v340
        %v342 = vmul.f32 %v341, 0.1818
        %v343 = vmul.f32 %v338, -0.9423
        %v344 = vmul.f32 %v343, 1.442695
        %v345 = vpow.pop %v344
        %v346 = vmul.f32 %v345, 0.5099
        %v347 = vadd.f32 %v342, %v346
        %v348 = vmul.f32 %v338, -0.4028
        %v349 = vmul.f32 %v348, 1.442695
        %v350 = vpow.pop %v349
        %v351 = vmul.f32 %v350, 0.2802
        %v352 = vadd.f32 %v347, %v351
        %v353 = vmul.f32 %v338, -0.2016
        %v354 = vmul.f32 %v353, 1.442695
        %v355 = vpow.pop %v354
        %v356 = vmul.f32 %v355, 0.02817
        %v357 = vadd.f32 %v352, %v356
        %v358 = vmul.f32 %v331, 14.3996
        %v359 = vmul.f32 %v358, %v332
        %v360 = vmul.f32 %v359, %v357
        %v361 = vrcp.pop %v330
        %v362 = vmul.f32 %v360, %v361
        %v363 = vrcp.pop %v333
        %v364 = vmul.f32 %v330, %v363
        %v365 = vmul.f32 %v364, %v364
        %v366 = vmul.f32 %v365, %v365
        %v367 = vmul.f32 %v365, %v366
        %v368 = vmul.f32 %v367, %v364
        %v369 = vmul.f32 %v368, %v364
        %v370 = vmul.f32 %v367, 28.0
        %v371 = vsub.f32 1.0, %v370
        %v372 = vmul.f32 %v368, 48.0
        %v373 = vadd.f32 %v371, %v372
        %v374 = vmul.f32 %v369, 21.0
        %v375 = vsub.f32 %v373, %v374
        %vm376 = vcmp.lt.f32.partialorder %v330, %v333
        %v377 = vsel %vm376, %v375, 0.0
        %v378 = vmul.f32 %v362, 0.5
        %v379 = vmul.f32 %v378, %v377
        %v380 = vlaneseq
        %vm381 = vcmp.ge.s32.totalorder %v380, 0
        %vm382 = vcmp.lt.s32.totalorder %v380, 512
        %vm383 = vmand %vm381, %vm382
        %384 = vst.msk [vmem:[%s324] sm:$0xf] %vm383, %v379
        %s385 = sand.u32 %s139, 1
        %s386 = scalar_lea.sflag [#allocation4], %s385
        %s387 = sand.u32 %s139, 1
        %s388 = smul.addr %s387, 4
        %s389 = scalar_lea.vmem [#allocation10], %s388
        // Predicated region
        $region53: #{tpu_custom_call.1} parent=35 // pred_check
          %p390 = pneg %p149
        $region54: #{tpu_custom_call.1} parent=35 // pred_check_branch
          %392 = sbr.rel (%p390) target = $region56
        $region55: #{tpu_custom_call.1} parent=35 // pred_region
          %s393 = smul.u32 4, %s27
          %s395 = ssub.s32 64, 64
          %396 = vsyncadd %s386, %s395
          %s397 = smul.addr %s393, 16
          %s398 = scalar_lea.hbm %s4, %s397
          %s400 = sshll.u32 %s389, 4
          %s401 = int_to_ptr.vmem [resolvable:$true] %s400
          %403 = dma.vmem_to_hbm [thread:$0]  %s401, 64, %s398, %s386
        $region56: #{tpu_custom_call.1} parent=35 // pred_fallthru
          _
      $region36: #{tpu_custom_call.1} parent=5 // pred_fallthru
        _
      %p404 = scmp.le.s32.totalorder 2, %s22
      // Predicated region
      $region57: #{tpu_custom_call.1} parent=5 // pred_check
        %p405 = pneg %p404
      $region58: #{tpu_custom_call.1} parent=5 // pred_check_branch
        %407 = sbr.rel (%p405) target = $region60
      $region59: #{tpu_custom_call.1} parent=5 // pred_region
        %s408 = ssub.s32 %s22, 2
        // Predicated region
        $region61: #{tpu_custom_call.1} parent=59 // pred_check
          %p409 = pneg %p155
        $region62: #{tpu_custom_call.1} parent=59 // pred_check_branch
          %411 = sbr.rel (%p409) target = $region64
        $region63: #{tpu_custom_call.1} parent=59 // pred_region
          %s412 = sand.u32 %s140, 1
          %s413 = scalar_lea.sflag [#allocation4], %s412
          %s414 = sand.u32 %s140, 1
          %s415 = smul.addr %s414, 4
          %s416 = scalar_lea.vmem [#allocation10], %s415
          %417 = dma.done %s413, 64
        $region64: #{tpu_custom_call.1} parent=59 // pred_fallthru
          _
      $region60: #{tpu_custom_call.1} parent=5 // pred_fallthru
        _
    $region6: #{tpu_custom_call.1} parent=1 // loop_footer
      %s26 = sadd.s32 1, %s22
    $region7: #{tpu_custom_call.1} parent=1 // loop_footer_branch
      %21 = sbr.rel target = $region3
    $region8: #{tpu_custom_call.1} parent=1 // loop_exit
      _
    %418 = vsyncpa [#allocation3], 1
    %s419 = scalar_lea.sflag [#allocation3], 1
    %420 = vsyncpa %s419, 1
    %421 = vsyncpa [#allocation6], 1
    %s422 = scalar_lea.sflag [#allocation6], 1
    %423 = vsyncpa %s422, 1
    %424 = vsyncpa [#allocation9], 1
    %s425 = scalar_lea.sflag [#allocation9], 1
    %426 = vsyncpa %s425, 1
    %427 = vsyncpa [#allocation4], 1
    %s428 = scalar_lea.sflag [#allocation4], 1
    %429 = vsyncpa %s428, 1

</llo_original>
